<compile_context>
chip_gen: v7x
topology: tpu7x:2x2x1
jax: 0.10.0
libtpu: 0.0.40
codegen_flags: <defaults>
</compile_context>

<pallas_src>
import jax
import jax.numpy as jnp
from jax import lax
from jax.experimental import pallas as pl
from jax.experimental.pallas import tpu as pltpu

_EPS = 1e-12            # F.normalize eps
_EPS2 = _EPS * _EPS     # compare against the squared norm (sqrt is monotone)


# -----------------------------------------------------------------------------
# Pallas kernel: one surface per grid step, stencil over the control-point grid.
# -----------------------------------------------------------------------------
def _normal_sq_err(ax, ay, az, bx, by, bz, cx, cy, cz, nx0, ny0, nz0):
    """Squared error between normalize(normalize(cross(C-A, C-B))) and (nx0,ny0,nz0)."""
    b0x, b0y, b0z = cx - ax, cy - ay, cz - az        # b0 = C - A
    b1x, b1y, b1z = cx - bx, cy - by, cz - bz        # b1 = C - B
    # cross(b0, b1)
    nx = b0y * b1z - b0z * b1y
    ny = b0z * b1x - b0x * b1z
    nz = b0x * b1y - b0y * b1x
    # First F.normalize (inside get_surface_normals): x / max(||x||, eps)
    #   == x * rsqrt(max(||x||^2, eps^2)).  Degenerate triangles stay exactly 0.
    inv1 = lax.rsqrt(jnp.maximum(nx * nx + ny * ny + nz * nz, _EPS2))
    nx, ny, nz = nx * inv1, ny * inv1, nz * inv1
    # Second F.normalize (applied after concatenation in compute_tri_normals).
    inv2 = lax.rsqrt(jnp.maximum(nx * nx + ny * ny + nz * nz, _EPS2))
    nx, ny, nz = nx * inv2, ny * inv2, nz * inv2
    dx, dy, dz = nx - nx0, ny - ny0, nz - nz0
    return dx * dx + dy * dy + dz * dz


def _tri_normal_loss_kernel(cps_ref, n0_ref, out_ref):
    # cps_ref: (1, 3, U, V)       current control points, xyz as leading planes
    # n0_ref : (1, 6, U-1, V-1)   stored normals [lx, ly, lz, rx, ry, rz] per cell
    # out_ref: (1, U-1, V-1)      per-cell squared error (left + right triangle)
    v = cps_ref[0]                       # (3, U, V)
    n0 = n0_ref[0]                       # (6, U-1, V-1)
    x, y, z = v[0], v[1], v[2]

    # Four shifted corner views of the grid (pure in-VMEM slices).
    x00, y00, z00 = x[:-1, :-1], y[:-1, :-1], z[:-1, :-1]   # P(i,   j)
    x01, y01, z01 = x[:-1, 1:],  y[:-1, 1:],  z[:-1, 1:]    # P(i,   j+1)
    x10, y10, z10 = x[1:, :-1],  y[1:, :-1],  z[1:, :-1]    # P(i+1, j)
    x11, y11, z11 = x[1:, 1:],   y[1:, 1:],   z[1:, 1:]     # P(i+1, j+1)

    # Left triangle : A = P(i,j),   B = P(i,j+1),   C = P(i+1,j)
    sq_l = _normal_sq_err(x00, y00, z00, x01, y01, z01, x10, y10, z10,
                          n0[0], n0[1], n0[2])
    # Right triangle: A = P(i,j+1), B = P(i+1,j+1), C = P(i+1,j)
    sq_r = _normal_sq_err(x01, y01, z01, x11, y11, z11, x10, y10, z10,
                          n0[3], n0[4], n0[5])

    out_ref[0] = sq_l + sq_r


# -----------------------------------------------------------------------------
# Wrapper: forward pass (curr control points vs. cached, pre-packed normals).
# -----------------------------------------------------------------------------
def triangle_normal_loss_pallas(curr_cps, packed_init_normals):
    """curr_cps: (S, U, V, 3) current control points.
    packed_init_normals: (S, 6, U-1, V-1) f32 stored initial triangle normals,
      produced once at __init__ time by pack_initial_normals().
    Returns the scalar MSE loss.
    """
    # TODO(synk): ignore_rotations=True path (per-surface change-of-basis
    # rotation of the normals before the final normalization) is not implemented.
    assert curr_cps.ndim == 4 and curr_cps.shape[-1] == 3
    s, u, v, _ = curr_cps.shape
    assert packed_init_normals.shape == (s, 6, u - 1, v - 1)

    # One cheap relayout of the control points so xyz become leading planes and
    # (U, V) land on (sublane, lane); each surface block is then one contiguous
    # HBM slab (~6 B/triangle) instead of 9 expanded corner coordinates.
    cps_t = jnp.moveaxis(curr_cps.astype(jnp.float32), -1, 1)   # (S, 3, U, V)

    # Per-step VMEM footprint (inputs + output); raise the scoped-VMEM limit
    # only when a single surface actually needs it (keeps headroom on v7x's
    # 64 MiB parts).
    # TODO(synk): block very large single surfaces along U with a one-row halo
    # instead of loading the whole grid per step.
    per_step_bytes = 4 * (3 * u * v + 7 * (u - 1) * (v - 1))
    vmem_need = 2 * per_step_bytes + (1 << 20)        # double-buffered + slack
    vmem_limit = min(vmem_need, 60 << 20) if vmem_need > (32 << 20) else None

    sq = pl.pallas_call(
        _tri_normal_loss_kernel,
        out_shape=jax.ShapeDtypeStruct((s, u - 1, v - 1), jnp.float32),
        grid_spec=pltpu.PrefetchScalarGridSpec(
            num_scalar_prefetch=0,
            grid=(s,),
            in_specs=[
                pl.BlockSpec((1, 3, u, v), lambda i: (i, 0, 0, 0)),
                pl.BlockSpec((1, 6, u - 1, v - 1), lambda i: (i, 0, 0, 0)),
            ],
            out_specs=pl.BlockSpec((1, u - 1, v - 1), lambda i: (i, 0, 0)),
        ),
        compiler_params=pltpu.CompilerParams(
            dimension_semantics=("parallel",),
            vmem_limit_bytes=vmem_limit),
    )(cps_t, packed_init_normals)

    # MSELoss(reduction='mean') over all N*3 normal components.
    n_elems = s * 2 * (u - 1) * (v - 1) * 3
    return jnp.sum(sq) / jnp.float32(n_elems)


# -----------------------------------------------------------------------------
# __init__-time packing of the stored normals (done once, cached).
# -----------------------------------------------------------------------------
def pack_initial_normals(init_normals_flat, grid_shape):
    """(N, 3) flat normals (module ordering: per surface left tris then right
    tris, cells row-major) -> (S, 6, U-1, V-1) kernel layout."""
    s, u, v = grid_shape
    n = init_normals_flat.astype(jnp.float32).reshape(s, 2, u - 1, v - 1, 3)
    n = jnp.moveaxis(n, -1, 2)                       # (S, 2, 3, U-1, V-1)
    return n.reshape(s, 6, u - 1, v - 1)             # [lx,ly,lz,rx,ry,rz]


# -----------------------------------------------------------------------------
# Plain-JAX reference (mirrors TriangleNormalLoss.compute_tri_normals); also the
# "__init__" glue that produces the stored initial normals in module order.
# -----------------------------------------------------------------------------
def _gather_tri_vertices(cps):
    """cps: (S, U, V, 3) -> A, B, C each (N, 3), N = S*2*(U-1)*(V-1).
    Per surface: left triangles (row-major cells) then right triangles."""
    s = cps.shape[0]
    a_l = cps[:, :-1, :-1, :].reshape(s, -1, 3)   # P(i, j)
    b_l = cps[:, :-1, 1:, :].reshape(s, -1, 3)    # P(i, j+1)
    c_l = cps[:, 1:, :-1, :].reshape(s, -1, 3)    # P(i+1, j)
    a_r = cps[:, :-1, 1:, :].reshape(s, -1, 3)    # P(i, j+1)
    b_r = cps[:, 1:, 1:, :].reshape(s, -1, 3)     # P(i+1, j+1)
    c_r = cps[:, 1:, :-1, :].reshape(s, -1, 3)    # P(i+1, j)
    a = jnp.concatenate([a_l, a_r], axis=1).reshape(-1, 3)
    b = jnp.concatenate([b_l, b_r], axis=1).reshape(-1, 3)
    c = jnp.concatenate([c_l, c_r], axis=1).reshape(-1, 3)
    return a, b, c


def compute_tri_normals_ref(cps):
    """cps: (S, U, V, 3) -> (N, 3) triangle normals (ignore_rotations=False)."""
    a, b, c = _gather_tri_vertices(cps.astype(jnp.float32))
    b0 = c - a
    b1 = c - b
    nrm = jnp.cross(b0, b1)
    nrm = nrm / jnp.maximum(
        jnp.linalg.norm(nrm, axis=-1, keepdims=True), _EPS)   # per-triangle
    nrm = nrm / jnp.maximum(
        jnp.linalg.norm(nrm, axis=-1, keepdims=True), _EPS)   # final F.normalize
    return nrm


# -----------------------------------------------------------------------------
# Demo / correctness check
# -----------------------------------------------------------------------------
if __name__ == "__main__":
    def run_case(key, s, u, v):
        k_init, k_noise = jax.random.split(key)
        init_cps = jax.random.normal(k_init, (s, u, v, 3), dtype=jnp.float32)
        # "current" surfaces = initial surfaces after a few optimisation steps.
        curr_cps = init_cps + 0.05 * jax.random.normal(
            k_noise, (s, u, v, 3), dtype=jnp.float32)

        # --- __init__ equivalent (deterministic; packed once, cached) ----------
        init_normals = compute_tri_normals_ref(init_cps)              # (N, 3)
        packed_init = pack_initial_normals(init_normals, (s, u, v))   # (S,6,U-1,V-1)

        # --- forward via Pallas -------------------------------------------------
        loss = jax.block_until_ready(
            triangle_normal_loss_pallas(curr_cps, packed_init))

        # --- pure-JAX reference (mirrors the PyTorch forward) -------------------
        curr_normals = compute_tri_normals_ref(curr_cps)
        ref_loss = jnp.mean((curr_normals - init_normals) ** 2)

        assert jnp.allclose(loss, ref_loss, rtol=1e-4, atol=1e-7), (
            (s, u, v), loss, ref_loss)

    key = jax.random.PRNGKey(0)
    k1, k2 = jax.random.split(key)
    run_case(k1, 3, 17, 17)     # small grid: 3 * 2 * 16 * 16  = 1536 triangles
    run_case(k2, 2, 21, 160)    # V > 128: slices cross lane-tile boundaries
    print("KERNEL_OK")
</pallas_src>

<mosaic_0001>
module attributes {stable_mosaic.version = 11 : i64} {
  func.func @_tri_normal_loss_kernel(%arg0: i32, %arg1: memref<1x3x17x17xf32, #tpu.memory_space<vmem>>, %arg2: memref<1x6x16x16xf32, #tpu.memory_space<vmem>>, %arg3: memref<1x16x16xf32, #tpu.memory_space<vmem>>) attributes {dimension_semantics = [#tpu.dimension_semantics<parallel>], iteration_bounds = array<i64: 3>, scalar_prefetch = 0 : i64, scratch_operands = 0 : i64, tpu.core_type = #tpu.core_type<tc>, window_params = [{transform_indices = @transform_0, window_bounds = array<i64: 1, 3, 17, 17>}, {transform_indices = @transform_1, window_bounds = array<i64: 1, 6, 16, 16>}, {transform_indices = @transform_2, window_bounds = array<i64: 1, 16, 16>}]} {
    %c0 = arith.constant 0 : index
    %c0_0 = arith.constant 0 : index
    %c0_1 = arith.constant 0 : index
    %c0_2 = arith.constant 0 : index
    %0 = vector.load %arg1[%c0, %c0_0, %c0_1, %c0_2] : memref<1x3x17x17xf32, #tpu.memory_space<vmem>>, vector<1x3x17x17xf32>
    %1 = vector.shape_cast %0 : vector<1x3x17x17xf32> to vector<3x17x17xf32>
    %c0_3 = arith.constant 0 : index
    %c0_4 = arith.constant 0 : index
    %c0_5 = arith.constant 0 : index
    %c0_6 = arith.constant 0 : index
    %2 = vector.load %arg2[%c0_3, %c0_4, %c0_5, %c0_6] : memref<1x6x16x16xf32, #tpu.memory_space<vmem>>, vector<1x6x16x16xf32>
    %3 = vector.shape_cast %2 : vector<1x6x16x16xf32> to vector<6x16x16xf32>
    %4 = vector.extract_strided_slice %1 {offsets = [0, 0, 0], sizes = [1, 17, 17], strides = [1, 1, 1]} : vector<3x17x17xf32> to vector<1x17x17xf32>
    %5 = vector.shape_cast %4 : vector<1x17x17xf32> to vector<17x17xf32>
    %6 = vector.extract_strided_slice %1 {offsets = [1, 0, 0], sizes = [1, 17, 17], strides = [1, 1, 1]} : vector<3x17x17xf32> to vector<1x17x17xf32>
    %7 = vector.shape_cast %6 : vector<1x17x17xf32> to vector<17x17xf32>
    %8 = vector.extract_strided_slice %1 {offsets = [2, 0, 0], sizes = [1, 17, 17], strides = [1, 1, 1]} : vector<3x17x17xf32> to vector<1x17x17xf32>
    %9 = vector.shape_cast %8 : vector<1x17x17xf32> to vector<17x17xf32>
    %10 = vector.extract_strided_slice %5 {offsets = [0, 0], sizes = [16, 16], strides = [1, 1]} : vector<17x17xf32> to vector<16x16xf32>
    %11 = vector.extract_strided_slice %7 {offsets = [0, 0], sizes = [16, 16], strides = [1, 1]} : vector<17x17xf32> to vector<16x16xf32>
    %12 = vector.extract_strided_slice %9 {offsets = [0, 0], sizes = [16, 16], strides = [1, 1]} : vector<17x17xf32> to vector<16x16xf32>
    %13 = vector.extract_strided_slice %5 {offsets = [0, 1], sizes = [16, 16], strides = [1, 1]} : vector<17x17xf32> to vector<16x16xf32>
    %14 = vector.extract_strided_slice %7 {offsets = [0, 1], sizes = [16, 16], strides = [1, 1]} : vector<17x17xf32> to vector<16x16xf32>
    %15 = vector.extract_strided_slice %9 {offsets = [0, 1], sizes = [16, 16], strides = [1, 1]} : vector<17x17xf32> to vector<16x16xf32>
    %16 = vector.extract_strided_slice %5 {offsets = [1, 0], sizes = [16, 16], strides = [1, 1]} : vector<17x17xf32> to vector<16x16xf32>
    %17 = vector.extract_strided_slice %7 {offsets = [1, 0], sizes = [16, 16], strides = [1, 1]} : vector<17x17xf32> to vector<16x16xf32>
    %18 = vector.extract_strided_slice %9 {offsets = [1, 0], sizes = [16, 16], strides = [1, 1]} : vector<17x17xf32> to vector<16x16xf32>
    %19 = vector.extract_strided_slice %5 {offsets = [1, 1], sizes = [16, 16], strides = [1, 1]} : vector<17x17xf32> to vector<16x16xf32>
    %20 = vector.extract_strided_slice %7 {offsets = [1, 1], sizes = [16, 16], strides = [1, 1]} : vector<17x17xf32> to vector<16x16xf32>
    %21 = vector.extract_strided_slice %9 {offsets = [1, 1], sizes = [16, 16], strides = [1, 1]} : vector<17x17xf32> to vector<16x16xf32>
    %22 = vector.extract_strided_slice %3 {offsets = [0, 0, 0], sizes = [1, 16, 16], strides = [1, 1, 1]} : vector<6x16x16xf32> to vector<1x16x16xf32>
    %23 = vector.shape_cast %22 : vector<1x16x16xf32> to vector<16x16xf32>
    %24 = vector.extract_strided_slice %3 {offsets = [1, 0, 0], sizes = [1, 16, 16], strides = [1, 1, 1]} : vector<6x16x16xf32> to vector<1x16x16xf32>
    %25 = vector.shape_cast %24 : vector<1x16x16xf32> to vector<16x16xf32>
    %26 = vector.extract_strided_slice %3 {offsets = [2, 0, 0], sizes = [1, 16, 16], strides = [1, 1, 1]} : vector<6x16x16xf32> to vector<1x16x16xf32>
    %27 = vector.shape_cast %26 : vector<1x16x16xf32> to vector<16x16xf32>
    %28 = arith.subf %16, %10 : vector<16x16xf32>
    %29 = arith.subf %17, %11 : vector<16x16xf32>
    %30 = arith.subf %18, %12 : vector<16x16xf32>
    %31 = arith.subf %16, %13 : vector<16x16xf32>
    %32 = arith.subf %17, %14 : vector<16x16xf32>
    %33 = arith.subf %18, %15 : vector<16x16xf32>
    %34 = arith.mulf %29, %33 : vector<16x16xf32>
    %35 = arith.mulf %30, %32 : vector<16x16xf32>
    %36 = arith.subf %34, %35 : vector<16x16xf32>
    %37 = arith.mulf %30, %31 : vector<16x16xf32>
    %38 = arith.mulf %28, %33 : vector<16x16xf32>
    %39 = arith.subf %37, %38 : vector<16x16xf32>
    %40 = arith.mulf %28, %32 : vector<16x16xf32>
    %41 = arith.mulf %29, %31 : vector<16x16xf32>
    %42 = arith.subf %40, %41 : vector<16x16xf32>
    %43 = arith.mulf %36, %36 : vector<16x16xf32>
    %44 = arith.mulf %39, %39 : vector<16x16xf32>
    %45 = arith.addf %43, %44 : vector<16x16xf32>
    %46 = arith.mulf %42, %42 : vector<16x16xf32>
    %47 = arith.addf %45, %46 : vector<16x16xf32>
    %cst = arith.constant 1.000000e-24 : f32
    %48 = vector.broadcast %cst : f32 to vector<16x16xf32>
    %49 = arith.maximumf %47, %48 : vector<16x16xf32>
    %50 = math.rsqrt %49 : vector<16x16xf32>
    %51 = arith.mulf %36, %50 : vector<16x16xf32>
    %52 = arith.mulf %39, %50 : vector<16x16xf32>
    %53 = arith.mulf %42, %50 : vector<16x16xf32>
    %54 = arith.mulf %51, %51 : vector<16x16xf32>
    %55 = arith.mulf %52, %52 : vector<16x16xf32>
    %56 = arith.addf %54, %55 : vector<16x16xf32>
    %57 = arith.mulf %53, %53 : vector<16x16xf32>
    %58 = arith.addf %56, %57 : vector<16x16xf32>
    %cst_7 = arith.constant 1.000000e-24 : f32
    %59 = vector.broadcast %cst_7 : f32 to vector<16x16xf32>
    %60 = arith.maximumf %58, %59 : vector<16x16xf32>
    %61 = math.rsqrt %60 : vector<16x16xf32>
    %62 = arith.mulf %51, %61 : vector<16x16xf32>
    %63 = arith.mulf %52, %61 : vector<16x16xf32>
    %64 = arith.mulf %53, %61 : vector<16x16xf32>
    %65 = arith.subf %62, %23 : vector<16x16xf32>
    %66 = arith.subf %63, %25 : vector<16x16xf32>
    %67 = arith.subf %64, %27 : vector<16x16xf32>
    %68 = arith.mulf %65, %65 : vector<16x16xf32>
    %69 = arith.mulf %66, %66 : vector<16x16xf32>
    %70 = arith.addf %68, %69 : vector<16x16xf32>
    %71 = arith.mulf %67, %67 : vector<16x16xf32>
    %72 = arith.addf %70, %71 : vector<16x16xf32>
    %73 = vector.extract_strided_slice %3 {offsets = [3, 0, 0], sizes = [1, 16, 16], strides = [1, 1, 1]} : vector<6x16x16xf32> to vector<1x16x16xf32>
    %74 = vector.shape_cast %73 : vector<1x16x16xf32> to vector<16x16xf32>
    %75 = vector.extract_strided_slice %3 {offsets = [4, 0, 0], sizes = [1, 16, 16], strides = [1, 1, 1]} : vector<6x16x16xf32> to vector<1x16x16xf32>
    %76 = vector.shape_cast %75 : vector<1x16x16xf32> to vector<16x16xf32>
    %77 = vector.extract_strided_slice %3 {offsets = [5, 0, 0], sizes = [1, 16, 16], strides = [1, 1, 1]} : vector<6x16x16xf32> to vector<1x16x16xf32>
    %78 = vector.shape_cast %77 : vector<1x16x16xf32> to vector<16x16xf32>
    %79 = arith.subf %16, %13 : vector<16x16xf32>
    %80 = arith.subf %17, %14 : vector<16x16xf32>
    %81 = arith.subf %18, %15 : vector<16x16xf32>
    %82 = arith.subf %16, %19 : vector<16x16xf32>
    %83 = arith.subf %17, %20 : vector<16x16xf32>
    %84 = arith.subf %18, %21 : vector<16x16xf32>
    %85 = arith.mulf %80, %84 : vector<16x16xf32>
    %86 = arith.mulf %81, %83 : vector<16x16xf32>
    %87 = arith.subf %85, %86 : vector<16x16xf32>
    %88 = arith.mulf %81, %82 : vector<16x16xf32>
    %89 = arith.mulf %79, %84 : vector<16x16xf32>
    %90 = arith.subf %88, %89 : vector<16x16xf32>
    %91 = arith.mulf %79, %83 : vector<16x16xf32>
    %92 = arith.mulf %80, %82 : vector<16x16xf32>
    %93 = arith.subf %91, %92 : vector<16x16xf32>
    %94 = arith.mulf %87, %87 : vector<16x16xf32>
    %95 = arith.mulf %90, %90 : vector<16x16xf32>
    %96 = arith.addf %94, %95 : vector<16x16xf32>
    %97 = arith.mulf %93, %93 : vector<16x16xf32>
    %98 = arith.addf %96, %97 : vector<16x16xf32>
    %cst_8 = arith.constant 1.000000e-24 : f32
    %99 = vector.broadcast %cst_8 : f32 to vector<16x16xf32>
    %100 = arith.maximumf %98, %99 : vector<16x16xf32>
    %101 = math.rsqrt %100 : vector<16x16xf32>
    %102 = arith.mulf %87, %101 : vector<16x16xf32>
    %103 = arith.mulf %90, %101 : vector<16x16xf32>
    %104 = arith.mulf %93, %101 : vector<16x16xf32>
    %105 = arith.mulf %102, %102 : vector<16x16xf32>
    %106 = arith.mulf %103, %103 : vector<16x16xf32>
    %107 = arith.addf %105, %106 : vector<16x16xf32>
    %108 = arith.mulf %104, %104 : vector<16x16xf32>
    %109 = arith.addf %107, %108 : vector<16x16xf32>
    %cst_9 = arith.constant 1.000000e-24 : f32
    %110 = vector.broadcast %cst_9 : f32 to vector<16x16xf32>
    %111 = arith.maximumf %109, %110 : vector<16x16xf32>
    %112 = math.rsqrt %111 : vector<16x16xf32>
    %113 = arith.mulf %102, %112 : vector<16x16xf32>
    %114 = arith.mulf %103, %112 : vector<16x16xf32>
    %115 = arith.mulf %104, %112 : vector<16x16xf32>
    %116 = arith.subf %113, %74 : vector<16x16xf32>
    %117 = arith.subf %114, %76 : vector<16x16xf32>
    %118 = arith.subf %115, %78 : vector<16x16xf32>
    %119 = arith.mulf %116, %116 : vector<16x16xf32>
    %120 = arith.mulf %117, %117 : vector<16x16xf32>
    %121 = arith.addf %119, %120 : vector<16x16xf32>
    %122 = arith.mulf %118, %118 : vector<16x16xf32>
    %123 = arith.addf %121, %122 : vector<16x16xf32>
    %124 = arith.addf %72, %123 : vector<16x16xf32>
    %c0_10 = arith.constant 0 : index
    %c0_11 = arith.constant 0 : index
    %c0_12 = arith.constant 0 : index
    %125 = vector.load %arg3[%c0_10, %c0_11, %c0_12] : memref<1x16x16xf32, #tpu.memory_space<vmem>>, vector<1x16x16xf32>
    %126 = vector.shape_cast %125 : vector<1x16x16xf32> to vector<16x16xf32>
    %127 = vector.shape_cast %124 : vector<16x16xf32> to vector<1x16x16xf32>
    tpu.vector_store %arg3[%c0_10, %c0_11, %c0_12], %127 {strides = array<i32>} : memref<1x16x16xf32, #tpu.memory_space<vmem>>, vector<1x16x16xf32>,
    return
  }
  func.func @transform_0(%arg0: i32) -> (i32, i32, i32, i32) {
    %c0_i32 = arith.constant 0 : i32
    %c0_i32_0 = arith.constant 0 : i32
    %c0_i32_1 = arith.constant 0 : i32
    %c0_i32_2 = arith.constant 0 : i32
    return %arg0, %c0_i32, %c0_i32_0, %c0_i32_1 : i32, i32, i32, i32
  }
  func.func @transform_1(%arg0: i32) -> (i32, i32, i32, i32) {
    %c0_i32 = arith.constant 0 : i32
    %c0_i32_0 = arith.constant 0 : i32
    %c0_i32_1 = arith.constant 0 : i32
    %c0_i32_2 = arith.constant 0 : i32
    return %arg0, %c0_i32, %c0_i32_0, %c0_i32_1 : i32, i32, i32, i32
  }
  func.func @transform_2(%arg0: i32) -> (i32, i32, i32) {
    %c0_i32 = arith.constant 0 : i32
    %c0_i32_0 = arith.constant 0 : i32
    %c0_i32_1 = arith.constant 0 : i32
    return %arg0, %c0_i32, %c0_i32_0 : i32, i32, i32
  }
}

</mosaic_0001>

<llo_original>
// kernel: tpu_custom_call.1
$region0: #{tpu_custom_call.1}
  #allocation0 [shape = 'u32[]', space=smem, size = 0x4, offset = 0x4, fixed_abs, tag = 'smem constant byte address 0x4 - core index']
  #allocation1 [shape = 'u32[144,128]{1,0:T(1,128)}', space=vmem, size = 0x12000, scoped, tag = 'internal scratch']
  %s0 = inlined_call_operand.vmem [shape: f32[3,3,17,17], index: 0, kind: input, shape index: {}]
  %s1 = inlined_call_operand.vmem [shape: f32[3,6,16,16], index: 1, kind: input, shape index: {}]
  %s2 = inlined_call_operand.hbm [shape: f32[3,16,16], index: 2, kind: output, shape index: {}]
  %s3 = sld [smem:[#allocation0]]
  $region41: #{tpu_custom_call.1} parent=0
    _
  %s5 = ssub.s32 1, %s3
  %s6 = scalar_select 0, %s5, %s3
  $region1: #{tpu_custom_call.1} parent=0
    #allocation2 [shape = 'u8[16384]{0}', space=vmem, size = 0x4000, scoped, tag = 'output window, operand 0']
    #allocation3 [shape = 's32[2]{0}', space=sflag, size = 0x8, scoped, tag = 'scoped memory for tpu_custom_call.1']
    %7 = vsyncpa [#allocation3], 0
    %s8 = scalar_lea.sflag [#allocation3], 1
    %9 = vsyncpa %s8, 0
    loop: start=0, step=1, limit=5
    $region2: #{tpu_custom_call.1} parent=1 // loop_pre_header
      _
    $region3: #{tpu_custom_call.1} parent=1 // loop_header
      %s11 = sphi 0, %s15
      %p12 = scmp.ge.s32.totalorder %s11, 5
      %s21 = sphi 0, %s23
      %s24 = sphi 0, %s21
      %s25 = sphi 0, %s24
      %s41 = sphi 0, %s25
      %s47 = sphi 0, %s49
      %s50 = sphi 0, %s47
      %s51 = sphi 0, %s50
      %s67 = sphi 0, %s51
      %s73 = sphi 0, %s75
      %s76 = sphi 0, %s73
      %s77 = sphi 0, %s76
      %s93 = sphi 0, %s77
    $region4: #{tpu_custom_call.1} parent=1 // loop_header_branch
      %14 = sbr.rel (%p12) target = $region8
    $region5: #{tpu_custom_call.1} parent=1 // loop_body
      %s16 = ssub.s32 %s11, 1
      %s17 = ssub.s32 %s11, 2
      %s18 = sadd.s32 %s11, 1
      %s19 = ssub.s32 %s11, %s18
      %p20 = scmp.eq.s32.totalorder %s19, 0
      %s22 = sadd.s32 %s21, 1
      %s23 = scalar_select %p20, %s21, %s22
      %p26 = pneg %p20
      %p27 = scmp.eq.s32.totalorder %s11, 2
      %p28 = por %p26, %p27
      %p29 = scmp.ne.s32.totalorder %s21, %s24
      %p30 = scmp.eq.s32.totalorder %s11, 0
      %p31 = por %p29, %p30
      %p32 = scmp.ne.s32.totalorder %s21, %s24
      %p33 = scmp.eq.s32.totalorder %s16, 2
      %p34 = por %p32, %p33
      %p35 = scmp.ne.s32.totalorder %s24, %s25
      %p36 = scmp.eq.s32.totalorder %s16, 0
      %p37 = por %p35, %p36
      %p38 = scmp.ne.s32.totalorder %s24, %s25
      %p39 = scmp.eq.s32.totalorder %s17, 2
      %p40 = por %p38, %p39
      %p42 = scmp.ne.s32.totalorder %s25, %s41
      %p43 = scmp.eq.s32.totalorder %s17, 0
      %p44 = por %p42, %p43
      %s45 = ssub.s32 %s11, %s18
      %p46 = scmp.eq.s32.totalorder %s45, 0
      %s48 = sadd.s32 %s47, 1
      %s49 = scalar_select %p46, %s47, %s48
      %p52 = pneg %p46
      %p53 = scmp.eq.s32.totalorder %s11, 2
      %p54 = por %p52, %p53
      %p55 = scmp.ne.s32.totalorder %s47, %s50
      %p56 = scmp.eq.s32.totalorder %s11, 0
      %p57 = por %p55, %p56
      %p58 = scmp.ne.s32.totalorder %s47, %s50
      %p59 = scmp.eq.s32.totalorder %s16, 2
      %p60 = por %p58, %p59
      %p61 = scmp.ne.s32.totalorder %s50, %s51
      %p62 = scmp.eq.s32.totalorder %s16, 0
      %p63 = por %p61, %p62
      %p64 = scmp.ne.s32.totalorder %s50, %s51
      %p65 = scmp.eq.s32.totalorder %s17, 2
      %p66 = por %p64, %p65
      %p68 = scmp.ne.s32.totalorder %s51, %s67
      %p69 = scmp.eq.s32.totalorder %s17, 0
      %p70 = por %p68, %p69
      %s71 = ssub.s32 %s11, %s18
      %p72 = scmp.eq.s32.totalorder %s71, 0
      %s74 = sadd.s32 %s73, 1
      %s75 = scalar_select %p72, %s73, %s74
      %p78 = pneg %p72
      %p79 = scmp.eq.s32.totalorder %s11, 2
      %p80 = por %p78, %p79
      %p81 = scmp.ne.s32.totalorder %s73, %s76
      %p82 = scmp.eq.s32.totalorder %s11, 0
      %p83 = por %p81, %p82
      %p84 = scmp.ne.s32.totalorder %s73, %s76
      %p85 = scmp.eq.s32.totalorder %s16, 2
      %p86 = por %p84, %p85
      %p87 = scmp.ne.s32.totalorder %s76, %s77
      %p88 = scmp.eq.s32.totalorder %s16, 0
      %p89 = por %p87, %p88
      %p90 = scmp.ne.s32.totalorder %s76, %s77
      %p91 = scmp.eq.s32.totalorder %s17, 2
      %p92 = por %p90, %p91
      %p94 = scmp.ne.s32.totalorder %s77, %s93
      %p95 = scmp.eq.s32.totalorder %s17, 0
      %p96 = por %p94, %p95
      %p97 = scmp.le.s32.totalorder 1, %s11
      %p98 = scmp.lt.s32.totalorder %s11, 4
      %p99 = pnand %p97, %p98
      %p100 = pneg %p99
      // Predicated region
      $region9: #{tpu_custom_call.1} parent=5 // pred_check
        _
      $region10: #{tpu_custom_call.1} parent=5 // pred_check_branch
        %102 = sbr.rel (%p99) target = $region12
      $region11: #{tpu_custom_call.1} parent=5 // pred_region
        %s103 = ssub.s32 %s11, 1
      $region12: #{tpu_custom_call.1} parent=5 // pred_fallthru
        _
      %p104 = scmp.lt.s32.totalorder %s11, 3
      // Predicated region
      $region13: #{tpu_custom_call.1} parent=5 // pred_check
        %p105 = pneg %p104
      $region14: #{tpu_custom_call.1} parent=5 // pred_check_branch
        %107 = sbr.rel (%p105) target = $region16
      $region15: #{tpu_custom_call.1} parent=5 // pred_region
        // Predicated region
        $region17: #{tpu_custom_call.1} parent=15 // pred_check
          %p108 = pneg %p31
        $region18: #{tpu_custom_call.1} parent=15 // pred_check_branch
          %110 = sbr.rel (%p108) target = $region20
        $region19: #{tpu_custom_call.1} parent=15 // pred_region
          %p111 = scmp.lt.s32.totalorder %s11, 2
          %s112 = scalar_select %p111, %s11, 2
          %s113 = smul.addr %s112, 9
          %s114 = smul.addr %s113, 8
          %s115 = scalar_lea.vmem %s0, %s114
        $region20: #{tpu_custom_call.1} parent=15 // pred_fallthru
          _
        // Predicated region
        $region21: #{tpu_custom_call.1} parent=15 // pred_check
          %p116 = pneg %p57
        $region22: #{tpu_custom_call.1} parent=15 // pred_check_branch
          %118 = sbr.rel (%p116) target = $region24
        $region23: #{tpu_custom_call.1} parent=15 // pred_region
          %p119 = scmp.lt.s32.totalorder %s11, 2
          %s120 = scalar_select %p119, %s11, 2
          %s121 = smul.addr %s120, 12
          %s122 = smul.addr %s121, 8
          %s123 = scalar_lea.vmem %s1, %s122
        $region24: #{tpu_custom_call.1} parent=15 // pred_fallthru
          _
      $region16: #{tpu_custom_call.1} parent=5 // pred_fallthru
        _
      %p124 = scmp.le.s32.totalorder 1, %s11
      %p125 = scmp.lt.s32.totalorder %s11, 4
      %p126 = pnand %p124, %p125
      %p127 = pneg %p126
      // Predicated region
      $region25: #{tpu_custom_call.1} parent=5 // pred_check
        _
      $region26: #{tpu_custom_call.1} parent=5 // pred_check_branch
        %129 = sbr.rel (%p126) target = $region28
      $region27: #{tpu_custom_call.1} parent=5 // pred_region
        %s130 = ssub.s32 %s11, 1
        %p131 = scmp.lt.s32.totalorder %s16, 2
        %s132 = scalar_select %p131, %s16, 2
        %s133 = smul.addr %s132, 9
        %s134 = smul.addr %s133, 8
        %s135 = scalar_lea.vmem %s0, %s134
        %p136 = pneg %p37
        %p137 = pneg %p34
        %p138 = scmp.lt.s32.totalorder %s16, 2
        %s139 = scalar_select %p138, %s16, 2
        %s140 = smul.addr %s139, 12
        %s141 = smul.addr %s140, 8
        %s142 = scalar_lea.vmem %s1, %s141
        %p143 = pneg %p63
        %p144 = pneg %p60
        %p145 = pneg %p89
        %p146 = pneg %p86
        %s147 = sand.u32 %s76, 1
        %s148 = scalar_lea.sflag [#allocation3], %s147
        %s149 = sand.u32 %s76, 1
        %s150 = smul.addr %s149, 16
        %s151 = scalar_lea.vmem [#allocation2], %s150
        %p152 = scmp.lt.s32.totalorder %s16, 2
        %s153 = scalar_select %p152, %s16, 2
        %s154 = smul.addr %s153, 9
        %s155 = smul.addr %s154, 8
        %s156 = scalar_lea.vmem %s0, %s155
        %p157 = scmp.lt.s32.totalorder %s16, 2
        %s158 = scalar_select %p157, %s16, 2
        %s159 = smul.addr %s158, 12
        %s160 = smul.addr %s159, 8
        %s161 = scalar_lea.vmem %s1, %s160
        %v162 = vld [vmem:[%s156] sm:$0xff]
        %v163 = vld [vmem:[%s156 + $0x8] sm:$0xff]
        %v164 = vld [vmem:[%s156 + $0x10] sm:$0x1]
        %v165 = vld [vmem:[%s156 + $0x18] sm:$0xff]
        %v166 = vld [vmem:[%s156 + $0x20] sm:$0xff]
        %v167 = vld [vmem:[%s156 + $0x28] sm:$0x1]
        %v168 = vld [vmem:[%s156 + $0x30] sm:$0xff]
        %v169 = vld [vmem:[%s156 + $0x38] sm:$0xff]
        %v170 = vld [vmem:[%s156 + $0x40] sm:$0x1]
        %v171 = vld [vmem:[%s161] sm:$0xff]
        %v172 = vld [vmem:[%s161 + $0x8] sm:$0xff]
        %v173 = vld [vmem:[%s161 + $0x10] sm:$0xff]
        %v174 = vld [vmem:[%s161 + $0x18] sm:$0xff]
        %v175 = vld [vmem:[%s161 + $0x20] sm:$0xff]
        %v176 = vld [vmem:[%s161 + $0x28] sm:$0xff]
        %v177 = vld [vmem:[%s161 + $0x30] sm:$0xff]
        %v178 = vld [vmem:[%s161 + $0x38] sm:$0xff]
        %v179 = vld [vmem:[%s161 + $0x40] sm:$0xff]
        %v180 = vld [vmem:[%s161 + $0x48] sm:$0xff]
        %v181 = vld [vmem:[%s161 + $0x50] sm:$0xff]
        %v182 = vld [vmem:[%s161 + $0x58] sm:$0xff]
        %vm185 = vcmask 1040384
        %v186 = vrot.slane %v162, 7
        %v187 = vrot.slane %v163, 7
        %v188 = vsel %vm185, %v186, %v187
        %v192 = vsub.f32 %v162, %v186
        %v193 = vsub.f32 %v163, %v188
        %v194 = vsub.f32 %v164, %v187
        %v197 = vrot.slane %v165, 7
        %v198 = vrot.slane %v166, 7
        %v199 = vsel %vm185, %v197, %v198
        %v203 = vsub.f32 %v165, %v197
        %v204 = vsub.f32 %v166, %v199
        %v205 = vsub.f32 %v167, %v198
        %v208 = vrot.slane %v168, 7
        %v209 = vrot.slane %v169, 7
        %v210 = vsel %vm185, %v208, %v209
        %v214 = vsub.f32 %v168, %v208
        %v215 = vsub.f32 %v169, %v210
        %v216 = vsub.f32 %v170, %v209
        %217 = vrot.lane.b32.xlu0 %v186, 127
        %v218 = vpop.permute.xlu0 %217
        %219 = vrot.lane.b32.xlu0 %v188, 127
        %v220 = vpop.permute.xlu0 %219
        %221 = vrot.lane.b32.xlu0 %v187, 127
        %v222 = vpop.permute.xlu0 %221
        %v226 = vsub.f32 %v162, %v218
        %v227 = vsub.f32 %v163, %v220
        %v228 = vsub.f32 %v164, %v222
        %229 = vrot.lane.b32.xlu0 %v197, 127
        %v230 = vpop.permute.xlu0 %229
        %231 = vrot.lane.b32.xlu0 %v199, 127
        %v232 = vpop.permute.xlu0 %231
        %233 = vrot.lane.b32.xlu0 %v198, 127
        %v234 = vpop.permute.xlu0 %233
        %v238 = vsub.f32 %v165, %v230
        %v239 = vsub.f32 %v166, %v232
        %v240 = vsub.f32 %v167, %v234
        %241 = vrot.lane.b32.xlu0 %v208, 127
        %v242 = vpop.permute.xlu0 %241
        %243 = vrot.lane.b32.xlu0 %v210, 127
        %v244 = vpop.permute.xlu0 %243
        %245 = vrot.lane.b32.xlu0 %v209, 127
        %v246 = vpop.permute.xlu0 %245
        %v250 = vsub.f32 %v168, %v242
        %v251 = vsub.f32 %v169, %v244
        %v252 = vsub.f32 %v170, %v246
        %v253 = vmul.f32 %v203, %v250
        %v254 = vmul.f32 %v204, %v251
        %v255 = vmul.f32 %v205, %v252
        %v256 = vmul.f32 %v214, %v238
        %v257 = vmul.f32 %v215, %v239
        %v258 = vmul.f32 %v216, %v240
        %v259 = vsub.f32 %v253, %v256
        %v260 = vsub.f32 %v254, %v257
        %v261 = vsub.f32 %v255, %v258
        %v262 = vmul.f32 %v214, %v226
        %v263 = vmul.f32 %v215, %v227
        %v264 = vmul.f32 %v216, %v228
        %v265 = vmul.f32 %v192, %v250
        %v266 = vmul.f32 %v193, %v251
        %v267 = vmul.f32 %v194, %v252
        %v268 = vsub.f32 %v262, %v265
        %v269 = vsub.f32 %v263, %v266
        %v270 = vsub.f32 %v264, %v267
        %v271 = vmul.f32 %v192, %v238
        %v272 = vmul.f32 %v193, %v239
        %v273 = vmul.f32 %v194, %v240
        %v274 = vmul.f32 %v203, %v226
        %v275 = vmul.f32 %v204, %v227
        %v276 = vmul.f32 %v205, %v228
        %v277 = vsub.f32 %v271, %v274
        %v278 = vsub.f32 %v272, %v275
        %v279 = vsub.f32 %v273, %v276
        %v280 = vmul.f32 %v259, %v259
        %v281 = vmul.f32 %v260, %v260
        %v282 = vmul.f32 %v261, %v261
        %v283 = vmul.f32 %v268, %v268
        %v284 = vmul.f32 %v269, %v269
        %v285 = vmul.f32 %v270, %v270
        %v286 = vadd.f32 %v280, %v283
        %v287 = vadd.f32 %v281, %v284
        %v288 = vadd.f32 %v282, %v285
        %v289 = vmul.f32 %v277, %v277
        %v290 = vmul.f32 %v278, %v278
        %v291 = vmul.f32 %v279, %v279
        %v292 = vadd.f32 %v286, %v289
        %v293 = vadd.f32 %v287, %v290
        %v294 = vadd.f32 %v288, %v291
        %v295 = vmax.f32 %v292, 1e-24
        %v296 = vmax.f32 %v293, 1e-24
        %v297 = vmax.f32 %v294, 1e-24
        %v298 = vrsqrt.pop %v295
        %v299 = vrsqrt.pop %v296
        %v300 = vrsqrt.pop %v297
        %v301 = vmul.f32 %v259, %v298
        %v302 = vmul.f32 %v260, %v299
        %v303 = vmul.f32 %v261, %v300
        %v304 = vmul.f32 %v268, %v298
        %v305 = vmul.f32 %v269, %v299
        %v306 = vmul.f32 %v270, %v300
        %v307 = vmul.f32 %v277, %v298
        %v308 = vmul.f32 %v278, %v299
        %v309 = vmul.f32 %v279, %v300
        %v310 = vmul.f32 %v301, %v301
        %v311 = vmul.f32 %v302, %v302
        %v312 = vmul.f32 %v303, %v303
        %v313 = vmul.f32 %v304, %v304
        %v314 = vmul.f32 %v305, %v305
        %v315 = vmul.f32 %v306, %v306
        %v316 = vadd.f32 %v310, %v313
        %v317 = vadd.f32 %v311, %v314
        %v318 = vadd.f32 %v312, %v315
        %v319 = vmul.f32 %v307, %v307
        %v320 = vmul.f32 %v308, %v308
        %v321 = vmul.f32 %v309, %v309
        %v322 = vadd.f32 %v316, %v319
        %v323 = vadd.f32 %v317, %v320
        %v324 = vadd.f32 %v318, %v321
        %v325 = vmax.f32 %v322, 1e-24
        %v326 = vmax.f32 %v323, 1e-24
        %v327 = vmax.f32 %v324, 1e-24
        %v328 = vrsqrt.pop %v325
        %v329 = vrsqrt.pop %v326
        %v330 = vrsqrt.pop %v327
        %v331 = vmul.f32 %v301, %v328
        %v332 = vmul.f32 %v302, %v329
        %v333 = vmul.f32 %v303, %v330
        %v334 = vmul.f32 %v304, %v328
        %v335 = vmul.f32 %v305, %v329
        %v336 = vmul.f32 %v306, %v330
        %v337 = vmul.f32 %v307, %v328
        %v338 = vmul.f32 %v308, %v329
        %v339 = vmul.f32 %v309, %v330
        %v342 = vrot.slane %v171, 7
        %v343 = vrot.slane %v172, 7
        %v344 = vsel %vm185, %v342, %v343
        %v348 = vsub.f32 %v331, %v342
        %v349 = vsub.f32 %v332, %v344
        %v350 = vsub.f32 %v333, %v343
        %v353 = vrot.slane %v173, 7
        %v354 = vrot.slane %v174, 7
        %v355 = vsel %vm185, %v353, %v354
        %v359 = vsub.f32 %v334, %v353
        %v360 = vsub.f32 %v335, %v355
        %v361 = vsub.f32 %v336, %v354
        %v364 = vrot.slane %v175, 7
        %v365 = vrot.slane %v176, 7
        %v366 = vsel %vm185, %v364, %v365
        %v370 = vsub.f32 %v337, %v364
        %v371 = vsub.f32 %v338, %v366
        %v372 = vsub.f32 %v339, %v365
        %v373 = vmul.f32 %v348, %v348
        %v374 = vmul.f32 %v349, %v349
        %v375 = vmul.f32 %v350, %v350
        %v376 = vmul.f32 %v359, %v359
        %v377 = vmul.f32 %v360, %v360
        %v378 = vmul.f32 %v361, %v361
        %v379 = vadd.f32 %v373, %v376
        %v380 = vadd.f32 %v374, %v377
        %v381 = vadd.f32 %v375, %v378
        %v382 = vmul.f32 %v370, %v370
        %v383 = vmul.f32 %v371, %v371
        %v384 = vmul.f32 %v372, %v372
        %v385 = vadd.f32 %v379, %v382
        %v386 = vadd.f32 %v380, %v383
        %v387 = vadd.f32 %v381, %v384
        %389 = vrot.lane.b32.xlu0 %v162, 127
        %v390 = vpop.permute.xlu0 %389
        %391 = vrot.lane.b32.xlu0 %v163, 127
        %v392 = vpop.permute.xlu0 %391
        %393 = vrot.lane.b32.xlu0 %v164, 127
        %v394 = vpop.permute.xlu0 %393
        %v398 = vsub.f32 %v162, %v390
        %v399 = vsub.f32 %v163, %v392
        %v400 = vsub.f32 %v164, %v394
        %402 = vrot.lane.b32.xlu0 %v165, 127
        %v403 = vpop.permute.xlu0 %402
        %404 = vrot.lane.b32.xlu0 %v166, 127
        %v405 = vpop.permute.xlu0 %404
        %406 = vrot.lane.b32.xlu0 %v167, 127
        %v407 = vpop.permute.xlu0 %406
        %v411 = vsub.f32 %v165, %v403
        %v412 = vsub.f32 %v166, %v405
        %v413 = vsub.f32 %v167, %v407
        %415 = vrot.lane.b32.xlu0 %v168, 127
        %v416 = vpop.permute.xlu0 %415
        %417 = vrot.lane.b32.xlu0 %v169, 127
        %v418 = vpop.permute.xlu0 %417
        %419 = vrot.lane.b32.xlu0 %v170, 127
        %v420 = vpop.permute.xlu0 %419
        %v424 = vsub.f32 %v168, %v416
        %v425 = vsub.f32 %v169, %v418
        %v426 = vsub.f32 %v170, %v420
        %v427 = vmul.f32 %v238, %v424
        %v428 = vmul.f32 %v239, %v425
        %v429 = vmul.f32 %v240, %v426
        %v430 = vmul.f32 %v250, %v411
        %v431 = vmul.f32 %v251, %v412
        %v432 = vmul.f32 %v252, %v413
        %v433 = vsub.f32 %v427, %v430
        %v434 = vsub.f32 %v428, %v431
        %v435 = vsub.f32 %v429, %v432
        %v436 = vmul.f32 %v250, %v398
        %v437 = vmul.f32 %v251, %v399
        %v438 = vmul.f32 %v252, %v400
        %v439 = vmul.f32 %v226, %v424
        %v440 = vmul.f32 %v227, %v425
        %v441 = vmul.f32 %v228, %v426
        %v442 = vsub.f32 %v436, %v439
        %v443 = vsub.f32 %v437, %v440
        %v444 = vsub.f32 %v438, %v441
        %v445 = vmul.f32 %v226, %v411
        %v446 = vmul.f32 %v227, %v412
        %v447 = vmul.f32 %v228, %v413
        %v448 = vmul.f32 %v238, %v398
        %v449 = vmul.f32 %v239, %v399
        %v450 = vmul.f32 %v240, %v400
        %v451 = vsub.f32 %v445, %v448
        %v452 = vsub.f32 %v446, %v449
        %v453 = vsub.f32 %v447, %v450
        %v454 = vmul.f32 %v433, %v433
        %v455 = vmul.f32 %v434, %v434
        %v456 = vmul.f32 %v435, %v435
        %v457 = vmul.f32 %v442, %v442
        %v458 = vmul.f32 %v443, %v443
        %v459 = vmul.f32 %v444, %v444
        %v460 = vadd.f32 %v454, %v457
        %v461 = vadd.f32 %v455, %v458
        %v462 = vadd.f32 %v456, %v459
        %v463 = vmul.f32 %v451, %v451
        %v464 = vmul.f32 %v452, %v452
        %v465 = vmul.f32 %v453, %v453
        %v466 = vadd.f32 %v460, %v463
        %v467 = vadd.f32 %v461, %v464
        %v468 = vadd.f32 %v462, %v465
        %v469 = vmax.f32 %v466, 1e-24
        %v470 = vmax.f32 %v467, 1e-24
        %v471 = vmax.f32 %v468, 1e-24
        %v472 = vrsqrt.pop %v469
        %v473 = vrsqrt.pop %v470
        %v474 = vrsqrt.pop %v471
        %v475 = vmul.f32 %v433, %v472
        %v476 = vmul.f32 %v434, %v473
        %v477 = vmul.f32 %v435, %v474
        %v478 = vmul.f32 %v442, %v472
        %v479 = vmul.f32 %v443, %v473
        %v480 = vmul.f32 %v444, %v474
        %v481 = vmul.f32 %v451, %v472
        %v482 = vmul.f32 %v452, %v473
        %v483 = vmul.f32 %v453, %v474
        %v484 = vmul.f32 %v475, %v475
        %v485 = vmul.f32 %v476, %v476
        %v486 = vmul.f32 %v477, %v477
        %v487 = vmul.f32 %v478, %v478
        %v488 = vmul.f32 %v479, %v479
        %v489 = vmul.f32 %v480, %v480
        %v490 = vadd.f32 %v484, %v487
        %v491 = vadd.f32 %v485, %v488
        %v492 = vadd.f32 %v486, %v489
        %v493 = vmul.f32 %v481, %v481
        %v494 = vmul.f32 %v482, %v482
        %v495 = vmul.f32 %v483, %v483
        %v496 = vadd.f32 %v490, %v493
        %v497 = vadd.f32 %v491, %v494
        %v498 = vadd.f32 %v492, %v495
        %v499 = vmax.f32 %v496, 1e-24
        %v500 = vmax.f32 %v497, 1e-24
        %v501 = vmax.f32 %v498, 1e-24
        %v502 = vrsqrt.pop %v499
        %v503 = vrsqrt.pop %v500
        %v504 = vrsqrt.pop %v501
        %v505 = vmul.f32 %v475, %v502
        %v506 = vmul.f32 %v476, %v503
        %v507 = vmul.f32 %v477, %v504
        %v508 = vmul.f32 %v478, %v502
        %v509 = vmul.f32 %v479, %v503
        %v510 = vmul.f32 %v480, %v504
        %v511 = vmul.f32 %v481, %v502
        %v512 = vmul.f32 %v482, %v503
        %v513 = vmul.f32 %v483, %v504
        %v516 = vrot.slane %v177, 7
        %v517 = vrot.slane %v178, 7
        %v518 = vsel %vm185, %v516, %v517
        %v522 = vsub.f32 %v505, %v516
        %v523 = vsub.f32 %v506, %v518
        %v524 = vsub.f32 %v507, %v517
        %v527 = vrot.slane %v179, 7
        %v528 = vrot.slane %v180, 7
        %v529 = vsel %vm185, %v527, %v528
        %v533 = vsub.f32 %v508, %v527
        %v534 = vsub.f32 %v509, %v529
        %v535 = vsub.f32 %v510, %v528
        %v538 = vrot.slane %v181, 7
        %v539 = vrot.slane %v182, 7
        %v540 = vsel %vm185, %v538, %v539
        %v544 = vsub.f32 %v511, %v538
        %v545 = vsub.f32 %v512, %v540
        %v546 = vsub.f32 %v513, %v539
        %v547 = vmul.f32 %v522, %v522
        %v548 = vmul.f32 %v523, %v523
        %v549 = vmul.f32 %v524, %v524
        %v550 = vmul.f32 %v533, %v533
        %v551 = vmul.f32 %v534, %v534
        %v552 = vmul.f32 %v535, %v535
        %v553 = vadd.f32 %v547, %v550
        %v554 = vadd.f32 %v548, %v551
        %v555 = vadd.f32 %v549, %v552
        %v556 = vmul.f32 %v544, %v544
        %v557 = vmul.f32 %v545, %v545
        %v558 = vmul.f32 %v546, %v546
        %v559 = vadd.f32 %v553, %v556
        %v560 = vadd.f32 %v554, %v557
        %v561 = vadd.f32 %v555, %v558
        %v562 = vadd.f32 %v385, %v559
        %v563 = vadd.f32 %v386, %v560
        %v564 = vadd.f32 %v387, %v561
        %vm565 = vcmask 130049
        %566 = vst.msk [vmem:[%s151 - $0x1] sm:$0xfe] %vm565, %v562
        %vm567 = vcmask 130048
        %568 = vst.msk [vmem:[%s151 + $0x7] sm:$0xff] %vm567, %v563
        %vm569 = vcmask 122880
        %570 = vst.msk [vmem:[%s151 + $0xf] sm:$0x1] %vm569, %v564
        %s571 = sand.u32 %s76, 1
        %s572 = scalar_lea.sflag [#allocation3], %s571
        %s573 = sand.u32 %s76, 1
        %s574 = smul.addr %s573, 16
        %s575 = scalar_lea.vmem [#allocation2], %s574
        // Predicated region
        $region29: #{tpu_custom_call.1} parent=27 // pred_check
          %p576 = pneg %p86
        $region30: #{tpu_custom_call.1} parent=27 // pred_check_branch
          %578 = sbr.rel (%p576) target = $region32
        $region31: #{tpu_custom_call.1} parent=27 // pred_region
          %s580 = ssub.s32 256, 256
          %581 = vsyncadd %s572, %s580
          %s582 = smul.addr %s16, 2
          %s583 = smul.addr %s582, 128
          %s584 = scalar_lea.hbm %s2, %s583
          %s585 = sshll.u32 %s575, 4
          %s586 = int_to_ptr.vmem [resolvable:$true] %s585
          %591 = dma.vmem_to_hbm [thread:$0]  %s586, 256, %s584, %s572, 128, 128, 8
        $region32: #{tpu_custom_call.1} parent=27 // pred_fallthru
          _
      $region28: #{tpu_custom_call.1} parent=5 // pred_fallthru
        _
      %p592 = scmp.le.s32.totalorder 2, %s11
      // Predicated region
      $region33: #{tpu_custom_call.1} parent=5 // pred_check
        %p593 = pneg %p592
      $region34: #{tpu_custom_call.1} parent=5 // pred_check_branch
        %595 = sbr.rel (%p593) target = $region36
      $region35: #{tpu_custom_call.1} parent=5 // pred_region
        %s596 = ssub.s32 %s11, 2
        // Predicated region
        $region37: #{tpu_custom_call.1} parent=35 // pred_check
          %p597 = pneg %p92
        $region38: #{tpu_custom_call.1} parent=35 // pred_check_branch
          %599 = sbr.rel (%p597) target = $region40
        $region39: #{tpu_custom_call.1} parent=35 // pred_region
          %s600 = sand.u32 %s77, 1
          %s601 = scalar_lea.sflag [#allocation3], %s600
          %s602 = sand.u32 %s77, 1
          %s603 = smul.addr %s602, 16
          %s604 = scalar_lea.vmem [#allocation2], %s603
          %605 = dma.done %s601, 256
        $region40: #{tpu_custom_call.1} parent=35 // pred_fallthru
          _
      $region36: #{tpu_custom_call.1} parent=5 // pred_fallthru
        _
    $region6: #{tpu_custom_call.1} parent=1 // loop_footer
      %s15 = sadd.s32 1, %s11
    $region7: #{tpu_custom_call.1} parent=1 // loop_footer_branch
      %10 = sbr.rel target = $region3
    $region8: #{tpu_custom_call.1} parent=1 // loop_exit
      _
    %606 = vsyncpa [#allocation3], 1
    %s607 = scalar_lea.sflag [#allocation3], 1
    %608 = vsyncpa %s607, 1

</llo_original>
